<compile_context>
chip_gen: v7x
topology: tpu7x:2x2x1
jax: 0.10.0
libtpu: 0.0.40
codegen_flags: <defaults>
</compile_context>

<pallas_src>
import jax
import jax.numpy as jnp
from jax.experimental import pallas as pl
from jax.experimental.pallas import tpu as pltpu

NEG_SLOPE = 0.01   # nn.LeakyReLU default negative_slope
_SLAB_W = 64       # lane width of the packed parameter slab (max layer width)


def _leaky(x):
    # leaky_relu(x) == max(x, slope*x) for slope < 1  (pure VPU, no select)
    return jnp.maximum(x, NEG_SLOPE * x)


def _round_up(n, m):
    return ((n + m - 1) // m) * m


# ----------------------------------------------------------------------------
# Parameter packing (host side, run ONCE): fuse / pre-slice weights and
# concatenate everything into a single (R, 64) slab in the compute dtype.
# ----------------------------------------------------------------------------
def _pack_params(params, feat_dim, compute_dtype):
    """Pack all weights/biases into one (R, 64) slab.

    * lin4 applied to both input slots fused into blockdiag(W4, W4).
    * lin0 weight pre-sliced to its first 32 rows (concat-with-zeros block
      contributes nothing).
    * lin3 + LogSoftmax folded into logit-difference weights (wd, bd).
    * every hidden-layer weight zero-padded to a uniform (64, 64) tile so the
      kernel never lane-slices the slab (all dots run at K = N = 64).
    """
    f32 = jnp.float32
    d2 = 2 * feat_dim
    W = _SLAB_W

    w4 = params["w4"].astype(f32)                       # (D, 16)
    b4 = params["b4"].astype(f32)                       # (1, 16)
    w4blk = jnp.zeros((d2, W), f32)
    w4blk = w4blk.at[:feat_dim, :16].set(w4).at[feat_dim:, 16:32].set(w4)
    b45 = jnp.zeros((1, W), f32).at[:, :16].set(b4).at[:, 16:32].set(b4)

    w0s = params["w0"][:32, :].astype(f32)              # (32, 64)

    # lin3 + LogSoftmax(2 classes):  logp_j = -softplus(z_other - z_j)
    w3 = params["w3"].astype(f32)                       # (32, 2)
    b3 = params["b3"].astype(f32)                       # (1, 2)
    wd = jnp.stack([w3[:, 1] - w3[:, 0], w3[:, 0] - w3[:, 1]], axis=1)     # (32, 2)
    bd = jnp.stack([b3[0, 1] - b3[0, 0], b3[0, 0] - b3[0, 1]])[None, :]    # (1, 2)

    def pad_to(w, rows, cols=W):
        return jnp.zeros((rows, cols), f32).at[:w.shape[0], :w.shape[1]].set(w)

    d2p = _round_up(d2, 8)
    weight_segs = [
        ("w4blk", pad_to(w4blk, d2p)),                        # (d2p, 64)
        ("w5",    pad_to(params["w5"].astype(f32), W)),       # (64, 64)
        ("w0s",   pad_to(w0s, W)),                            # (64, 64)
        ("wg",    pad_to(params["wg"].astype(f32), W)),       # (64, 64)
        ("w1",    pad_to(params["w1"].astype(f32), W)),       # (64, 64)
        ("w2",    pad_to(params["w2"].astype(f32), W)),       # (64, 64)
        ("wd",    pad_to(wd, W)),                             # (64, 64)
    ]
    bias_rows = [b45, params["b5"].astype(f32), params["b0"].astype(f32),
                 params["bg"].astype(f32), params["b1"].astype(f32),
                 params["b2"].astype(f32), bd]

    blocks, offsets, r = [], {}, 0
    for name, blk in weight_segs:
        offsets[name] = r
        blocks.append(blk)
        r += int(blk.shape[0])

    bias_blk = jnp.zeros((8, W), f32)                    # 7 bias rows in one 8-row block
    for i, b in enumerate(bias_rows):
        bias_blk = bias_blk.at[i, : b.shape[1]].set(b[0])
    offsets["bias"] = r
    blocks.append(bias_blk)
    r += 8

    slab = jnp.concatenate(blocks, axis=0).astype(compute_dtype)   # (R, 64)
    return slab, offsets, r


# ----------------------------------------------------------------------------
# Kernel
# ----------------------------------------------------------------------------
def _make_kernel(offsets, d2, compute_dtype):
    o = dict(offsets)
    cdt = compute_dtype

    def kernel(x_ref, p_ref, out_ref):
        f32 = jnp.float32

        def w(name, rows=_SLAB_W):
            s = o[name]
            return p_ref[s:s + rows, :]            # 8-aligned static row slice, full 64 lanes

        bias = p_ref[o["bias"]:o["bias"] + 8, :].astype(f32)   # (8, 64)

        # f32 input streamed from HBM; cast to the matmul-operand dtype here
        # (no wrapper-side astype -> no extra HBM round trip over the input).
        x = x_ref[...].astype(cdt)                              # (tb, 2D)

        def dot(a, name, rows=_SLAB_W):
            return jnp.dot(a.astype(cdt), w(name, rows),
                           preferred_element_type=f32)

        h = _leaky(dot(x, "w4blk", d2) + bias[0:1])   # lin4, both slots fused  (tb, 64)
        h = _leaky(dot(h, "w5") + bias[1:2])          # lin5
        h = _leaky(dot(h, "w0s") + bias[2:3])         # lin0 (zero "attention" block dropped)
        h = _leaky(dot(h, "wg") + bias[3:4])          # lin_gru
        h = _leaky(dot(h, "w1") + bias[4:5])          # lin1
        h = _leaky(dot(h, "w2") + bias[5:6])          # lin2

        # lin3 + LogSoftmax(dim=1) over 2 classes, fully elementwise (no XLU):
        #   diff[:, j] = z_other - z_j   ->   logp_j = -softplus(diff[:, j])
        diff = dot(h, "wd") + bias[6:7]                                       # (tb, 64)
        sp = jnp.maximum(diff, 0.0) + jnp.log1p(jnp.exp(-jnp.abs(diff)))
        out_ref[...] = (-sp[:, :2]).astype(out_ref.dtype)

    return kernel


# ----------------------------------------------------------------------------
# Batch tiling
# ----------------------------------------------------------------------------
def _choose_tiling(B):
    """Return (padded_B, batch_tile).

    * Rows padded to a multiple of 16 (bf16 sublane pack) and of the tile.
    * Single grid step for small B (per-step overhead ~0.35 us dominates).
    * >= 2 "parallel" steps once B > 256 (v7x's second TensorCore), tiles
      capped near 512 rows so the input DMA pipelines behind compute; tile
      chosen so padding waste is <= 16 rows per step.
    """
    b16 = _round_up(B, 16)
    if b16 <= 256:
        return b16, b16
    n_steps = max(2, pl.cdiv(b16, 512))
    tb = _round_up(pl.cdiv(b16, n_steps), 16)
    return n_steps * tb, tb


# ----------------------------------------------------------------------------
# Forward factory (packs parameters ONCE, returns a jitted forward)
# ----------------------------------------------------------------------------
def make_attention_net_forward(params, feat_dim, *, compute_dtype=jnp.bfloat16):
    """Returns forward(inputTensor, rawUnitTensor, mask, stateTensor) -> (log_probs, state).

    compute_dtype is only the MXU operand dtype (slab storage + LHS cast); all
    accumulation and elementwise math stays f32, so bf16 is safe on v5e too.
    Use compute_dtype=jnp.float32 for a bit-faithful reference path.
    """
    slab, offsets, n_rows = _pack_params(params, feat_dim, compute_dtype)
    d2 = 2 * feat_dim
    kernel = _make_kernel(offsets, d2, compute_dtype)

    def forward(inputTensor, rawUnitTensor, mask, stateTensor):
        del rawUnitTensor, mask                 # unused by the reference forward()
        B, two, D = inputTensor.shape
        assert two == 2 and D == feat_dim

        b_pad, tb = _choose_tiling(B)

        # Lane-dense 2-D view; (B,2,D)->(B,2D) is a free contiguous reshape.
        x2d = inputTensor.reshape(B, d2)
        if b_pad != B:
            x2d = jnp.pad(x2d, ((0, b_pad - B), (0, 0)))

        out = pl.pallas_call(
            kernel,
            out_shape=jax.ShapeDtypeStruct((b_pad, 2), jnp.float32),
            grid=(b_pad // tb,),
            in_specs=[
                pl.BlockSpec((tb, d2), lambda i: (i, 0)),           # input tile
                # Constant block index -> Pallas does not re-DMA the slab
                # between grid steps; slab is ~50 KiB so its double buffer is
                # noise even under v7x's 64 MiB VMEM.
                pl.BlockSpec((n_rows, _SLAB_W), lambda i: (0, 0)),
            ],
            out_specs=pl.BlockSpec((tb, 2), lambda i: (i, 0)),
            compiler_params=pltpu.CompilerParams(
                dimension_semantics=("parallel",)),
        )(x2d, slab)
        return out[:B], stateTensor

    return jax.jit(forward)


def attention_net_forward(params, inputTensor, rawUnitTensor, mask, stateTensor,
                          *, compute_dtype=jnp.bfloat16):
    """One-shot convenience wrapper (re-packs params every call).
    Prefer make_attention_net_forward() so the slab is packed once and cached."""
    fwd = make_attention_net_forward(params, inputTensor.shape[-1],
                                     compute_dtype=compute_dtype)
    return fwd(inputTensor, rawUnitTensor, mask, stateTensor)


# ----------------------------------------------------------------------------
# Parameter init + pure-JAX reference (PyTorch-faithful) for correctness checks
# ----------------------------------------------------------------------------
def init_params(key, feat_dim):
    """Deterministic synthetic parameters matching AttentionNet's layer shapes."""
    shapes = {
        "w4": (feat_dim, 16), "b4": (1, 16),    # lin4: Linear(D, 16)
        "w5": (32, 32),       "b5": (1, 32),    # lin5: Linear(2*16, 32)
        "w0": (96, 64),       "b0": (1, 64),    # lin0: Linear(64+32, 64)
        "wg": (64, 32),       "bg": (1, 32),    # lin_gru: Linear(64, 32)
        "w1": (32, 32),       "b1": (1, 32),    # lin1
        "w2": (32, 32),       "b2": (1, 32),    # lin2
        "w3": (32, 2),        "b3": (1, 2),     # lin3: Linear(32, 2)
    }
    params = {}
    keys = jax.random.split(key, len(shapes))
    for k, (name, shape) in zip(keys, sorted(shapes.items())):
        params[name] = (0.1 * jax.random.normal(k, shape)).astype(jnp.float32)
    return params
    # TODO(synk): embedding / AttentionModule / GRUCell params are unused in
    # forward() and therefore intentionally not materialized.


def _reference_forward(params, x):
    """Pure-JAX f32 reference of the PyTorch forward (no shortcuts)."""
    B = x.shape[0]
    h = _leaky(jnp.einsum("bsd,df->bsf", x, params["w4"]) + params["b4"])
    h = h.reshape(B, -1)
    h = _leaky(h @ params["w5"] + params["b5"])
    h = jnp.concatenate([h, jnp.zeros((B, 64), jnp.float32)], axis=1)
    h = _leaky(h @ params["w0"] + params["b0"])
    h = _leaky(h @ params["wg"] + params["bg"])
    h = _leaky(h @ params["w1"] + params["b1"])
    h = _leaky(h @ params["w2"] + params["b2"])
    logits = h @ params["w3"] + params["b3"]
    return jax.nn.log_softmax(logits, axis=1)


if __name__ == "__main__":
    key = jax.random.PRNGKey(0)
    k_in, k_raw, k_par, k_big = jax.random.split(key, 4)

    B, D = 8, 16                      # small shapes: batch=8, input_shape[-1]=16
    inputTensor = jax.random.normal(k_in, (B, 2, D), dtype=jnp.float32)
    rawUnitTensor = jax.random.normal(k_raw, (B, 4, 11), dtype=jnp.float32)  # unused
    mask = jnp.ones((B, 4), dtype=jnp.float32)                               # unused
    stateTensor = jnp.zeros((B, 32), dtype=jnp.float32)

    params = init_params(k_par, D)
    ref = _reference_forward(params, inputTensor)

    # Exact f32 path (strict check against the PyTorch-faithful reference).
    fwd_f32 = make_attention_net_forward(params, D, compute_dtype=jnp.float32)
    lp32, state_out = fwd_f32(inputTensor, rawUnitTensor, mask, stateTensor)
    lp32 = jax.block_until_ready(lp32)
    assert lp32.shape == (B, 2)
    assert state_out.shape == (B, 32)
    assert jnp.allclose(lp32, ref, atol=2e-4), "f32 kernel mismatch vs reference"

    # Default bf16-operand path (all seven matmuls bf16, f32 accumulation).
    fwd_bf16 = make_attention_net_forward(params, D)
    lp16, _ = fwd_bf16(inputTensor, rawUnitTensor, mask, stateTensor)
    lp16 = jax.block_until_ready(lp16)
    assert jnp.allclose(lp16, ref, atol=5e-2), "bf16 kernel mismatch vs reference"

    # Larger / odd batch exercises padding + multi-step "parallel" grid path.
    B2 = 300
    big_in = jax.random.normal(k_big, (B2, 2, D), dtype=jnp.float32)
    ref_big = _reference_forward(params, big_in)
    lp_big, _ = fwd_bf16(big_in,
                         jnp.zeros((B2, 4, 11), jnp.float32),
                         jnp.ones((B2, 4), jnp.float32),
                         jnp.zeros((B2, 32), jnp.float32))
    lp_big = jax.block_until_ready(lp_big)
    assert lp_big.shape == (B2, 2)
    assert jnp.allclose(lp_big, ref_big, atol=5e-2), "bf16 multi-tile mismatch"

    print("KERNEL_OK")
</pallas_src>

<mosaic_0001>
module attributes {stable_mosaic.version = 11 : i64} {
  func.func @kernel(%arg0: i32, %arg1: memref<16x32xf32, #tpu.memory_space<vmem>>, %arg2: memref<424x64xf32, #tpu.memory_space<vmem>>, %arg3: memref<16x2xf32, #tpu.memory_space<vmem>>) attributes {dimension_semantics = [#tpu.dimension_semantics<parallel>], iteration_bounds = array<i64: 1>, scalar_prefetch = 0 : i64, scratch_operands = 0 : i64, tpu.core_type = #tpu.core_type<tc>, window_params = [{transform_indices = @transform_0, window_bounds = array<i64: 16, 32>}, {pipeline_mode = #tpu.pipeline_mode<synchronous>, transform_indices = @transform_1, window_bounds = array<i64: 424, 64>}, {transform_indices = @transform_2, window_bounds = array<i64: 16, 2>}]} {
    %c416 = arith.constant 416 : index
    %c0 = arith.constant 0 : index
    %0 = vector.load %arg2[%c416, %c0] : memref<424x64xf32, #tpu.memory_space<vmem>>, vector<8x64xf32>
    %c0_0 = arith.constant 0 : index
    %c0_1 = arith.constant 0 : index
    %1 = vector.load %arg1[%c0_0, %c0_1] : memref<16x32xf32, #tpu.memory_space<vmem>>, vector<16x32xf32>
    %c0_2 = arith.constant 0 : index
    %c0_3 = arith.constant 0 : index
    %2 = vector.load %arg2[%c0_2, %c0_3] : memref<424x64xf32, #tpu.memory_space<vmem>>, vector<32x64xf32>
    %cst = arith.constant dense<0.000000e+00> : vector<16x64xf32>
    %3 = tpu.matmul %1, %2, %cst {dimension_numbers = #tpu.dot_dimension_numbers<[1], [0], [0], [1], [0, 0, 1, 1], [], []>} : vector<16x32xf32>, vector<32x64xf32>, vector<16x64xf32> -> vector<16x64xf32>
    %4 = vector.extract_strided_slice %0 {offsets = [0, 0], sizes = [1, 64], strides = [1, 1]} : vector<8x64xf32> to vector<1x64xf32>
    %5 = vector.broadcast %4 : vector<1x64xf32> to vector<16x64xf32>
    %6 = arith.addf %3, %5 : vector<16x64xf32>
    %cst_4 = arith.constant 0.00999999977 : f32
    %7 = vector.broadcast %cst_4 : f32 to vector<16x64xf32>
    %8 = arith.mulf %7, %6 : vector<16x64xf32>
    %9 = arith.maximumf %6, %8 : vector<16x64xf32>
    %c32 = arith.constant 32 : index
    %c0_5 = arith.constant 0 : index
    %10 = vector.load %arg2[%c32, %c0_5] : memref<424x64xf32, #tpu.memory_space<vmem>>, vector<64x64xf32>
    %cst_6 = arith.constant dense<0.000000e+00> : vector<16x64xf32>
    %11 = tpu.matmul %9, %10, %cst_6 {dimension_numbers = #tpu.dot_dimension_numbers<[1], [0], [0], [1], [0, 0, 1, 1], [], []>} : vector<16x64xf32>, vector<64x64xf32>, vector<16x64xf32> -> vector<16x64xf32>
    %12 = vector.extract_strided_slice %0 {offsets = [1, 0], sizes = [1, 64], strides = [1, 1]} : vector<8x64xf32> to vector<1x64xf32>
    %13 = vector.broadcast %12 : vector<1x64xf32> to vector<16x64xf32>
    %14 = arith.addf %11, %13 : vector<16x64xf32>
    %cst_7 = arith.constant 0.00999999977 : f32
    %15 = vector.broadcast %cst_7 : f32 to vector<16x64xf32>
    %16 = arith.mulf %15, %14 : vector<16x64xf32>
    %17 = arith.maximumf %14, %16 : vector<16x64xf32>
    %c96 = arith.constant 96 : index
    %c0_8 = arith.constant 0 : index
    %18 = vector.load %arg2[%c96, %c0_8] : memref<424x64xf32, #tpu.memory_space<vmem>>, vector<64x64xf32>
    %cst_9 = arith.constant dense<0.000000e+00> : vector<16x64xf32>
    %19 = tpu.matmul %17, %18, %cst_9 {dimension_numbers = #tpu.dot_dimension_numbers<[1], [0], [0], [1], [0, 0, 1, 1], [], []>} : vector<16x64xf32>, vector<64x64xf32>, vector<16x64xf32> -> vector<16x64xf32>
    %20 = vector.extract_strided_slice %0 {offsets = [2, 0], sizes = [1, 64], strides = [1, 1]} : vector<8x64xf32> to vector<1x64xf32>
    %21 = vector.broadcast %20 : vector<1x64xf32> to vector<16x64xf32>
    %22 = arith.addf %19, %21 : vector<16x64xf32>
    %cst_10 = arith.constant 0.00999999977 : f32
    %23 = vector.broadcast %cst_10 : f32 to vector<16x64xf32>
    %24 = arith.mulf %23, %22 : vector<16x64xf32>
    %25 = arith.maximumf %22, %24 : vector<16x64xf32>
    %c160 = arith.constant 160 : index
    %c0_11 = arith.constant 0 : index
    %26 = vector.load %arg2[%c160, %c0_11] : memref<424x64xf32, #tpu.memory_space<vmem>>, vector<64x64xf32>
    %cst_12 = arith.constant dense<0.000000e+00> : vector<16x64xf32>
    %27 = tpu.matmul %25, %26, %cst_12 {dimension_numbers = #tpu.dot_dimension_numbers<[1], [0], [0], [1], [0, 0, 1, 1], [], []>} : vector<16x64xf32>, vector<64x64xf32>, vector<16x64xf32> -> vector<16x64xf32>
    %28 = vector.extract_strided_slice %0 {offsets = [3, 0], sizes = [1, 64], strides = [1, 1]} : vector<8x64xf32> to vector<1x64xf32>
    %29 = vector.broadcast %28 : vector<1x64xf32> to vector<16x64xf32>
    %30 = arith.addf %27, %29 : vector<16x64xf32>
    %cst_13 = arith.constant 0.00999999977 : f32
    %31 = vector.broadcast %cst_13 : f32 to vector<16x64xf32>
    %32 = arith.mulf %31, %30 : vector<16x64xf32>
    %33 = arith.maximumf %30, %32 : vector<16x64xf32>
    %c224 = arith.constant 224 : index
    %c0_14 = arith.constant 0 : index
    %34 = vector.load %arg2[%c224, %c0_14] : memref<424x64xf32, #tpu.memory_space<vmem>>, vector<64x64xf32>
    %cst_15 = arith.constant dense<0.000000e+00> : vector<16x64xf32>
    %35 = tpu.matmul %33, %34, %cst_15 {dimension_numbers = #tpu.dot_dimension_numbers<[1], [0], [0], [1], [0, 0, 1, 1], [], []>} : vector<16x64xf32>, vector<64x64xf32>, vector<16x64xf32> -> vector<16x64xf32>
    %36 = vector.extract_strided_slice %0 {offsets = [4, 0], sizes = [1, 64], strides = [1, 1]} : vector<8x64xf32> to vector<1x64xf32>
    %37 = vector.broadcast %36 : vector<1x64xf32> to vector<16x64xf32>
    %38 = arith.addf %35, %37 : vector<16x64xf32>
    %cst_16 = arith.constant 0.00999999977 : f32
    %39 = vector.broadcast %cst_16 : f32 to vector<16x64xf32>
    %40 = arith.mulf %39, %38 : vector<16x64xf32>
    %41 = arith.maximumf %38, %40 : vector<16x64xf32>
    %c288 = arith.constant 288 : index
    %c0_17 = arith.constant 0 : index
    %42 = vector.load %arg2[%c288, %c0_17] : memref<424x64xf32, #tpu.memory_space<vmem>>, vector<64x64xf32>
    %cst_18 = arith.constant dense<0.000000e+00> : vector<16x64xf32>
    %43 = tpu.matmul %41, %42, %cst_18 {dimension_numbers = #tpu.dot_dimension_numbers<[1], [0], [0], [1], [0, 0, 1, 1], [], []>} : vector<16x64xf32>, vector<64x64xf32>, vector<16x64xf32> -> vector<16x64xf32>
    %44 = vector.extract_strided_slice %0 {offsets = [5, 0], sizes = [1, 64], strides = [1, 1]} : vector<8x64xf32> to vector<1x64xf32>
    %45 = vector.broadcast %44 : vector<1x64xf32> to vector<16x64xf32>
    %46 = arith.addf %43, %45 : vector<16x64xf32>
    %cst_19 = arith.constant 0.00999999977 : f32
    %47 = vector.broadcast %cst_19 : f32 to vector<16x64xf32>
    %48 = arith.mulf %47, %46 : vector<16x64xf32>
    %49 = arith.maximumf %46, %48 : vector<16x64xf32>
    %c352 = arith.constant 352 : index
    %c0_20 = arith.constant 0 : index
    %50 = vector.load %arg2[%c352, %c0_20] : memref<424x64xf32, #tpu.memory_space<vmem>>, vector<64x64xf32>
    %cst_21 = arith.constant dense<0.000000e+00> : vector<16x64xf32>
    %51 = tpu.matmul %49, %50, %cst_21 {dimension_numbers = #tpu.dot_dimension_numbers<[1], [0], [0], [1], [0, 0, 1, 1], [], []>} : vector<16x64xf32>, vector<64x64xf32>, vector<16x64xf32> -> vector<16x64xf32>
    %52 = vector.extract_strided_slice %0 {offsets = [6, 0], sizes = [1, 64], strides = [1, 1]} : vector<8x64xf32> to vector<1x64xf32>
    %53 = vector.broadcast %52 : vector<1x64xf32> to vector<16x64xf32>
    %54 = arith.addf %51, %53 : vector<16x64xf32>
    %cst_22 = arith.constant 0.000000e+00 : f32
    %55 = vector.broadcast %cst_22 : f32 to vector<16x64xf32>
    %56 = arith.maximumf %54, %55 : vector<16x64xf32>
    %57 = math.absf %54 : vector<16x64xf32>
    %cst_23 = arith.constant 0.000000e+00 : f32
    %58 = vector.broadcast %cst_23 : f32 to vector<16x64xf32>
    %59 = arith.subf %58, %57 : vector<16x64xf32>
    %60 = math.exp %59 : vector<16x64xf32>
    %61 = math.log1p %60 : vector<16x64xf32>
    %62 = arith.addf %56, %61 : vector<16x64xf32>
    %63 = vector.extract_strided_slice %62 {offsets = [0, 0], sizes = [16, 2], strides = [1, 1]} : vector<16x64xf32> to vector<16x2xf32>
    %cst_24 = arith.constant 0.000000e+00 : f32
    %64 = vector.broadcast %cst_24 : f32 to vector<16x2xf32>
    %65 = arith.subf %64, %63 : vector<16x2xf32>
    %c0_25 = arith.constant 0 : index
    %c0_26 = arith.constant 0 : index
    %66 = vector.load %arg3[%c0_25, %c0_26] : memref<16x2xf32, #tpu.memory_space<vmem>>, vector<16x2xf32>
    tpu.vector_store %arg3[%c0_25, %c0_26], %65 {strides = array<i32>} : memref<16x2xf32, #tpu.memory_space<vmem>>, vector<16x2xf32>,
    return
  }
  func.func @transform_0(%arg0: i32) -> (i32, i32) {
    %c0_i32 = arith.constant 0 : i32
    %c0_i32_0 = arith.constant 0 : i32
    return %arg0, %c0_i32 : i32, i32
  }
  func.func @transform_1(%arg0: i32) -> (i32, i32) {
    %c0_i32 = arith.constant 0 : i32
    %c0_i32_0 = arith.constant 0 : i32
    %c0_i32_1 = arith.constant 0 : i32
    return %c0_i32, %c0_i32_0 : i32, i32
  }
  func.func @transform_2(%arg0: i32) -> (i32, i32) {
    %c0_i32 = arith.constant 0 : i32
    %c0_i32_0 = arith.constant 0 : i32
    return %arg0, %c0_i32 : i32, i32
  }
}

</mosaic_0001>

<llo_original>
// kernel: forward.1
$region0: #{forward.1}
  #allocation0 [shape = 'u32[]', space=smem, size = 0x4, offset = 0x4, fixed_abs, tag = 'smem constant byte address 0x4 - core index']
  #allocation1 [shape = 'u32[144,128]{1,0:T(1,128)}', space=vmem, size = 0x12000, scoped, tag = 'internal scratch']
  %s0 = inlined_call_operand.vmem [shape: f32[16,32], index: 0, kind: input, shape index: {}]
  %s1 = inlined_call_operand.hbm [shape: f32[424,64], index: 1, kind: input, shape index: {}]
  %s2 = inlined_call_operand.vmem [shape: f32[16,2], index: 2, kind: output, shape index: {}]
  %s3 = sld [smem:[#allocation0]]
  $region22: #{forward.1} parent=0
    _
  %s5 = ssub.s32 1, %s3
  %s6 = scalar_select 0, %s5, %s3
  $region1: #{forward.1} parent=0
    #allocation2 [shape = 'u8[217088]{0}', space=vmem, size = 0x35000, scoped, tag = 'input window, operand 1, single buffered']
    #allocation3 [shape = 's32[1]{0}', space=sflag, size = 0x4, scoped, tag = 'scoped memory for forward.1']
    %7 = vsyncpa [#allocation3], 0
    // Predicated region
    $region2: #{forward.1} parent=1 // pred_check
      _
    $region3: #{forward.1} parent=1 // pred_check_branch
      %9 = sbr.rel (0) target = $region5
    $region4: #{forward.1} parent=1 // pred_region
      _
    $region5: #{forward.1} parent=1 // pred_fallthru
      _
    // Predicated region
    $region6: #{forward.1} parent=1 // pred_check
      _
    $region7: #{forward.1} parent=1 // pred_check_branch
      %11 = sbr.rel (0) target = $region9
    $region8: #{forward.1} parent=1 // pred_region
      %s13 = ssub.s32 6784, 6784
      %14 = vsyncadd [#allocation3], %s13
      %s15 = sshll.u32 [#allocation2], 4
      %s16 = int_to_ptr.vmem [resolvable:$true] %s15
      %21 = dma.hbm_to_vmem [thread:$0]  %s1, 6784, %s16, [#allocation3], 128, 128, 8
    $region9: #{forward.1} parent=1 // pred_fallthru
      _
    // Predicated region
    $region10: #{forward.1} parent=1 // pred_check
      _
    $region11: #{forward.1} parent=1 // pred_check_branch
      %23 = sbr.rel (0) target = $region13
    $region12: #{forward.1} parent=1 // pred_region
      %24 = dma.done [#allocation3], 6784
    $region13: #{forward.1} parent=1 // pred_fallthru
      _
    %v25 = vld [vmem:[#allocation2 + $0x1a0] sm:$0xff]
    %v26 = vld [vmem:[%s0] sm:$0xff]
    %v27 = vld [vmem:[%s0 + $0x8] sm:$0xff]
    %v28 = vld [vmem:[#allocation2] sm:$0xff]
    %v29 = vld [vmem:[#allocation2 + $0x8] sm:$0xff]
    %v30 = vld [vmem:[#allocation2 + $0x10] sm:$0xff]
    %v31 = vld [vmem:[#allocation2 + $0x18] sm:$0xff]
    %v32 = vlaneseq
    %v33 = vshrl.u32 %v32, 7
    %v34 = vsub.s32 0, %v33
    %v35 = vrot.slane %v25, %v34
    %vm36 = vcmask 261120
    %v38 = vsel %vm36, %v26, 0
    %v41 = vsel %vm36, %v27, 0
    %43 = vmatprep.subr.mxu0 0.0
    %44 = vmatpush1.msra.mxu0 %v28
    %45 = vmatprep.subr.mxu0 0.0
    %46 = vmatpush1.msra.mxu0 %v29
    %47 = vmatprep.subr.mxu0 0.0
    %48 = vmatpush1.msra.mxu0 %v30
    %49 = vmatprep.subr.mxu0 0.0
    %50 = vmatpush1.msra.mxu0 %v31
    %51 = vmatprep.subr.mxu0 0.0
    %52 = vmatpush1.msra.mxu0 0.0
    %53 = vmatprep.subr.mxu0 0.0
    %54 = vmatpush1.msra.mxu0 0.0
    %55 = vmatprep.subr.mxu0 0.0
    %56 = vmatpush1.msra.mxu0 0.0
    %57 = vmatprep.subr.mxu0 0.0
    %58 = vmatpush1.msra.mxu0 0.0
    %59 = vmatprep.subr.mxu0 0.0
    %60 = vmatpush1.msra.mxu0 0.0
    %61 = vmatprep.subr.mxu0 0.0
    %62 = vmatpush1.msra.mxu0 0.0
    %63 = vmatprep.subr.mxu0 0.0
    %64 = vmatpush1.msra.mxu0 0.0
    %65 = vmatprep.subr.mxu0 0.0
    %66 = vmatpush1.msra.mxu0 0.0
    %67 = vmatprep.subr.mxu0 0.0
    %68 = vmatpush1.msra.mxu0 0.0
    %69 = vmatprep.subr.mxu0 0.0
    %70 = vmatpush1.msra.mxu0 0.0
    %71 = vmatprep.subr.mxu0 0.0
    %72 = vmatpush1.msra.mxu0 0.0
    %73 = vmatprep.subr.mxu0 0.0
    %74 = vmatpush1.msra.mxu0 0.0
    %75 = vmatprep.subr.mxu0 0.0
    %76 = vmatpush1.msra.mxu0 0.0
    %77 = vmatprep.subr.mxu0 0.0
    %78 = vmatpush1.msra.mxu0 0.0
    %79 = vmatprep.subr.mxu0 0.0
    %80 = vmatpush1.msra.mxu0 0.0
    %81 = vmatprep.subr.mxu0 0.0
    %82 = vmatpush1.msra.mxu0 0.0
    %83 = vmatprep.subr.mxu0 0.0
    %84 = vmatpush1.msra.mxu0 0.0
    %85 = vmatprep.subr.mxu0 0.0
    %86 = vmatpush1.msra.mxu0 0.0
    %87 = vmatprep.subr.mxu0 0.0
    %88 = vmatpush1.msra.mxu0 0.0
    %89 = vmatprep.subr.mxu0 0.0
    %90 = vmatpush1.msra.mxu0 0.0
    %91 = vmatprep.subr.mxu0 0.0
    %92 = vmatpush1.msra.mxu0 0.0
    %93 = vmatprep.subr.mxu0 0.0
    %94 = vmatpush1.msra.mxu0 0.0
    %95 = vmatprep.subr.mxu0 0.0
    %96 = vmatpush1.msra.mxu0 0.0
    %97 = vmatprep.subr.mxu0 0.0
    %98 = vmatpush1.msra.mxu0 0.0
    %99 = vmatprep.subr.mxu0 0.0
    %100 = vmatpush1.msra.mxu0 0.0
    %101 = vmatprep.subr.mxu0 0.0
    %102 = vmatpush1.msra.mxu0 0.0
    %103 = vmatprep.subr.mxu0 0.0
    %104 = vmatpush1.msra.mxu0 0.0
    %105 = vmatprep.subr.mxu0 0.0
    %106 = vmatpush1.msra.mxu0 0.0
    %107 = vmatprep.mubr.f32.mxu0 0.0
    %108 = vmatmul.mubr.f32.gmra.mrb[0].mxu0 %v38
    %v109 = vpop.f32.mrb[0].mxu0
    %v110 = vadd.f32 %v35, %v109
    %v111 = vpop.f32.mrb[0].mxu0
    %112 = vmatprep.mubr.f32.mxu0 0.0
    %113 = vmatmul.mubr.f32.gmra.mrb[0].mxu0 %v41
    %v114 = vpop.f32.mrb[0].mxu0
    %v115 = vadd.f32 %v35, %v114
    %v116 = vpop.f32.mrb[0].mxu0
    %117 = vdwg.mxu0
    %v118 = vmul.f32 %v110, 0.01
    %v119 = vmul.f32 %v115, 0.01
    %v120 = vmax.f32 %v110, %v118
    %v121 = vmax.f32 %v115, %v119
    %v122 = vld [vmem:[#allocation2 + $0x20] sm:$0xff]
    %v123 = vld [vmem:[#allocation2 + $0x28] sm:$0xff]
    %v124 = vld [vmem:[#allocation2 + $0x30] sm:$0xff]
    %v125 = vld [vmem:[#allocation2 + $0x38] sm:$0xff]
    %v126 = vld [vmem:[#allocation2 + $0x40] sm:$0xff]
    %v127 = vld [vmem:[#allocation2 + $0x48] sm:$0xff]
    %v128 = vld [vmem:[#allocation2 + $0x50] sm:$0xff]
    %v129 = vld [vmem:[#allocation2 + $0x58] sm:$0xff]
    %v130 = vlaneseq
    %v131 = vshrl.u32 %v130, 7
    %v132 = vsub.s32 1, %v131
    %v133 = vrot.slane %v25, %v132
    %vm134 = vcmask 523264
    %v136 = vsel %vm134, %v120, 0
    %v139 = vsel %vm134, %v121, 0
    %141 = vmatprep.subr.mxu0 0.0
    %142 = vmatpush1.msra.mxu0 %v122
    %143 = vmatprep.subr.mxu0 0.0
    %144 = vmatpush1.msra.mxu0 %v123
    %145 = vmatprep.subr.mxu0 0.0
    %146 = vmatpush1.msra.mxu0 %v124
    %147 = vmatprep.subr.mxu0 0.0
    %148 = vmatpush1.msra.mxu0 %v125
    %149 = vmatprep.subr.mxu0 0.0
    %150 = vmatpush1.msra.mxu0 %v126
    %151 = vmatprep.subr.mxu0 0.0
    %152 = vmatpush1.msra.mxu0 %v127
    %153 = vmatprep.subr.mxu0 0.0
    %154 = vmatpush1.msra.mxu0 %v128
    %155 = vmatprep.subr.mxu0 0.0
    %156 = vmatpush1.msra.mxu0 %v129
    %157 = vmatprep.subr.mxu0 0.0
    %158 = vmatpush1.msra.mxu0 0.0
    %159 = vmatprep.subr.mxu0 0.0
    %160 = vmatpush1.msra.mxu0 0.0
    %161 = vmatprep.subr.mxu0 0.0
    %162 = vmatpush1.msra.mxu0 0.0
    %163 = vmatprep.subr.mxu0 0.0
    %164 = vmatpush1.msra.mxu0 0.0
    %165 = vmatprep.subr.mxu0 0.0
    %166 = vmatpush1.msra.mxu0 0.0
    %167 = vmatprep.subr.mxu0 0.0
    %168 = vmatpush1.msra.mxu0 0.0
    %169 = vmatprep.subr.mxu0 0.0
    %170 = vmatpush1.msra.mxu0 0.0
    %171 = vmatprep.subr.mxu0 0.0
    %172 = vmatpush1.msra.mxu0 0.0
    %173 = vmatprep.subr.mxu0 0.0
    %174 = vmatpush1.msra.mxu0 0.0
    %175 = vmatprep.subr.mxu0 0.0
    %176 = vmatpush1.msra.mxu0 0.0
    %177 = vmatprep.subr.mxu0 0.0
    %178 = vmatpush1.msra.mxu0 0.0
    %179 = vmatprep.subr.mxu0 0.0
    %180 = vmatpush1.msra.mxu0 0.0
    %181 = vmatprep.subr.mxu0 0.0
    %182 = vmatpush1.msra.mxu0 0.0
    %183 = vmatprep.subr.mxu0 0.0
    %184 = vmatpush1.msra.mxu0 0.0
    %185 = vmatprep.subr.mxu0 0.0
    %186 = vmatpush1.msra.mxu0 0.0
    %187 = vmatprep.subr.mxu0 0.0
    %188 = vmatpush1.msra.mxu0 0.0
    %189 = vmatprep.subr.mxu0 0.0
    %190 = vmatpush1.msra.mxu0 0.0
    %191 = vmatprep.subr.mxu0 0.0
    %192 = vmatpush1.msra.mxu0 0.0
    %193 = vmatprep.subr.mxu0 0.0
    %194 = vmatpush1.msra.mxu0 0.0
    %195 = vmatprep.subr.mxu0 0.0
    %196 = vmatpush1.msra.mxu0 0.0
    %197 = vmatprep.subr.mxu0 0.0
    %198 = vmatpush1.msra.mxu0 0.0
    %199 = vmatprep.subr.mxu0 0.0
    %200 = vmatpush1.msra.mxu0 0.0
    %201 = vmatprep.subr.mxu0 0.0
    %202 = vmatpush1.msra.mxu0 0.0
    %203 = vmatprep.subr.mxu0 0.0
    %204 = vmatpush1.msra.mxu0 0.0
    %205 = vmatprep.mubr.f32.mxu0 0.0
    %206 = vmatmul.mubr.f32.gmra.mrb[0].mxu0 %v136
    %v207 = vpop.f32.mrb[0].mxu0
    %v208 = vadd.f32 %v133, %v207
    %v209 = vpop.f32.mrb[0].mxu0
    %210 = vmatprep.mubr.f32.mxu0 0.0
    %211 = vmatmul.mubr.f32.gmra.mrb[0].mxu0 %v139
    %v212 = vpop.f32.mrb[0].mxu0
    %v213 = vadd.f32 %v133, %v212
    %v214 = vpop.f32.mrb[0].mxu0
    %215 = vdwg.mxu0
    %v216 = vmul.f32 %v208, 0.01
    %v217 = vmul.f32 %v213, 0.01
    %v218 = vmax.f32 %v208, %v216
    %v219 = vmax.f32 %v213, %v217
    %v220 = vld [vmem:[#allocation2 + $0x60] sm:$0xff]
    %v221 = vld [vmem:[#allocation2 + $0x68] sm:$0xff]
    %v222 = vld [vmem:[#allocation2 + $0x70] sm:$0xff]
    %v223 = vld [vmem:[#allocation2 + $0x78] sm:$0xff]
    %v224 = vld [vmem:[#allocation2 + $0x80] sm:$0xff]
    %v225 = vld [vmem:[#allocation2 + $0x88] sm:$0xff]
    %v226 = vld [vmem:[#allocation2 + $0x90] sm:$0xff]
    %v227 = vld [vmem:[#allocation2 + $0x98] sm:$0xff]
    %v228 = vlaneseq
    %v229 = vshrl.u32 %v228, 7
    %v230 = vsub.s32 2, %v229
    %v231 = vrot.slane %v25, %v230
    %v233 = vsel %vm134, %v218, 0
    %v236 = vsel %vm134, %v219, 0
    %238 = vmatprep.subr.mxu0 0.0
    %239 = vmatpush1.msra.mxu0 %v220
    %240 = vmatprep.subr.mxu0 0.0
    %241 = vmatpush1.msra.mxu0 %v221
    %242 = vmatprep.subr.mxu0 0.0
    %243 = vmatpush1.msra.mxu0 %v222
    %244 = vmatprep.subr.mxu0 0.0
    %245 = vmatpush1.msra.mxu0 %v223
    %246 = vmatprep.subr.mxu0 0.0
    %247 = vmatpush1.msra.mxu0 %v224
    %248 = vmatprep.subr.mxu0 0.0
    %249 = vmatpush1.msra.mxu0 %v225
    %250 = vmatprep.subr.mxu0 0.0
    %251 = vmatpush1.msra.mxu0 %v226
    %252 = vmatprep.subr.mxu0 0.0
    %253 = vmatpush1.msra.mxu0 %v227
    %254 = vmatprep.subr.mxu0 0.0
    %255 = vmatpush1.msra.mxu0 0.0
    %256 = vmatprep.subr.mxu0 0.0
    %257 = vmatpush1.msra.mxu0 0.0
    %258 = vmatprep.subr.mxu0 0.0
    %259 = vmatpush1.msra.mxu0 0.0
    %260 = vmatprep.subr.mxu0 0.0
    %261 = vmatpush1.msra.mxu0 0.0
    %262 = vmatprep.subr.mxu0 0.0
    %263 = vmatpush1.msra.mxu0 0.0
    %264 = vmatprep.subr.mxu0 0.0
    %265 = vmatpush1.msra.mxu0 0.0
    %266 = vmatprep.subr.mxu0 0.0
    %267 = vmatpush1.msra.mxu0 0.0
    %268 = vmatprep.subr.mxu0 0.0
    %269 = vmatpush1.msra.mxu0 0.0
    %270 = vmatprep.subr.mxu0 0.0
    %271 = vmatpush1.msra.mxu0 0.0
    %272 = vmatprep.subr.mxu0 0.0
    %273 = vmatpush1.msra.mxu0 0.0
    %274 = vmatprep.subr.mxu0 0.0
    %275 = vmatpush1.msra.mxu0 0.0
    %276 = vmatprep.subr.mxu0 0.0
    %277 = vmatpush1.msra.mxu0 0.0
    %278 = vmatprep.subr.mxu0 0.0
    %279 = vmatpush1.msra.mxu0 0.0
    %280 = vmatprep.subr.mxu0 0.0
    %281 = vmatpush1.msra.mxu0 0.0
    %282 = vmatprep.subr.mxu0 0.0
    %283 = vmatpush1.msra.mxu0 0.0
    %284 = vmatprep.subr.mxu0 0.0
    %285 = vmatpush1.msra.mxu0 0.0
    %286 = vmatprep.subr.mxu0 0.0
    %287 = vmatpush1.msra.mxu0 0.0
    %288 = vmatprep.subr.mxu0 0.0
    %289 = vmatpush1.msra.mxu0 0.0
    %290 = vmatprep.subr.mxu0 0.0
    %291 = vmatpush1.msra.mxu0 0.0
    %292 = vmatprep.subr.mxu0 0.0
    %293 = vmatpush1.msra.mxu0 0.0
    %294 = vmatprep.subr.mxu0 0.0
    %295 = vmatpush1.msra.mxu0 0.0
    %296 = vmatprep.subr.mxu0 0.0
    %297 = vmatpush1.msra.mxu0 0.0
    %298 = vmatprep.subr.mxu0 0.0
    %299 = vmatpush1.msra.mxu0 0.0
    %300 = vmatprep.subr.mxu0 0.0
    %301 = vmatpush1.msra.mxu0 0.0
    %302 = vmatprep.mubr.f32.mxu0 0.0
    %303 = vmatmul.mubr.f32.gmra.mrb[0].mxu0 %v233
    %v304 = vpop.f32.mrb[0].mxu0
    %v305 = vadd.f32 %v231, %v304
    %v306 = vpop.f32.mrb[0].mxu0
    %307 = vmatprep.mubr.f32.mxu0 0.0
    %308 = vmatmul.mubr.f32.gmra.mrb[0].mxu0 %v236
    %v309 = vpop.f32.mrb[0].mxu0
    %v310 = vadd.f32 %v231, %v309
    %v311 = vpop.f32.mrb[0].mxu0
    %312 = vdwg.mxu0
    %v313 = vmul.f32 %v305, 0.01
    %v314 = vmul.f32 %v310, 0.01
    %v315 = vmax.f32 %v305, %v313
    %v316 = vmax.f32 %v310, %v314
    %v317 = vld [vmem:[#allocation2 + $0xa0] sm:$0xff]
    %v318 = vld [vmem:[#allocation2 + $0xa8] sm:$0xff]
    %v319 = vld [vmem:[#allocation2 + $0xb0] sm:$0xff]
    %v320 = vld [vmem:[#allocation2 + $0xb8] sm:$0xff]
    %v321 = vld [vmem:[#allocation2 + $0xc0] sm:$0xff]
    %v322 = vld [vmem:[#allocation2 + $0xc8] sm:$0xff]
    %v323 = vld [vmem:[#allocation2 + $0xd0] sm:$0xff]
    %v324 = vld [vmem:[#allocation2 + $0xd8] sm:$0xff]
    %v325 = vlaneseq
    %v326 = vshrl.u32 %v325, 7
    %v327 = vsub.s32 3, %v326
    %v328 = vrot.slane %v25, %v327
    %v330 = vsel %vm134, %v315, 0
    %v333 = vsel %vm134, %v316, 0
    %335 = vmatprep.subr.mxu0 0.0
    %336 = vmatpush1.msra.mxu0 %v317
    %337 = vmatprep.subr.mxu0 0.0
    %338 = vmatpush1.msra.mxu0 %v318
    %339 = vmatprep.subr.mxu0 0.0
    %340 = vmatpush1.msra.mxu0 %v319
    %341 = vmatprep.subr.mxu0 0.0
    %342 = vmatpush1.msra.mxu0 %v320
    %343 = vmatprep.subr.mxu0 0.0
    %344 = vmatpush1.msra.mxu0 %v321
    %345 = vmatprep.subr.mxu0 0.0
    %346 = vmatpush1.msra.mxu0 %v322
    %347 = vmatprep.subr.mxu0 0.0
    %348 = vmatpush1.msra.mxu0 %v323
    %349 = vmatprep.subr.mxu0 0.0
    %350 = vmatpush1.msra.mxu0 %v324
    %351 = vmatprep.subr.mxu0 0.0
    %352 = vmatpush1.msra.mxu0 0.0
    %353 = vmatprep.subr.mxu0 0.0
    %354 = vmatpush1.msra.mxu0 0.0
    %355 = vmatprep.subr.mxu0 0.0
    %356 = vmatpush1.msra.mxu0 0.0
    %357 = vmatprep.subr.mxu0 0.0
    %358 = vmatpush1.msra.mxu0 0.0
    %359 = vmatprep.subr.mxu0 0.0
    %360 = vmatpush1.msra.mxu0 0.0
    %361 = vmatprep.subr.mxu0 0.0
    %362 = vmatpush1.msra.mxu0 0.0
    %363 = vmatprep.subr.mxu0 0.0
    %364 = vmatpush1.msra.mxu0 0.0
    %365 = vmatprep.subr.mxu0 0.0
    %366 = vmatpush1.msra.mxu0 0.0
    %367 = vmatprep.subr.mxu0 0.0
    %368 = vmatpush1.msra.mxu0 0.0
    %369 = vmatprep.subr.mxu0 0.0
    %370 = vmatpush1.msra.mxu0 0.0
    %371 = vmatprep.subr.mxu0 0.0
    %372 = vmatpush1.msra.mxu0 0.0
    %373 = vmatprep.subr.mxu0 0.0
    %374 = vmatpush1.msra.mxu0 0.0
    %375 = vmatprep.subr.mxu0 0.0
    %376 = vmatpush1.msra.mxu0 0.0
    %377 = vmatprep.subr.mxu0 0.0
    %378 = vmatpush1.msra.mxu0 0.0
    %379 = vmatprep.subr.mxu0 0.0
    %380 = vmatpush1.msra.mxu0 0.0
    %381 = vmatprep.subr.mxu0 0.0
    %382 = vmatpush1.msra.mxu0 0.0
    %383 = vmatprep.subr.mxu0 0.0
    %384 = vmatpush1.msra.mxu0 0.0
    %385 = vmatprep.subr.mxu0 0.0
    %386 = vmatpush1.msra.mxu0 0.0
    %387 = vmatprep.subr.mxu0 0.0
    %388 = vmatpush1.msra.mxu0 0.0
    %389 = vmatprep.subr.mxu0 0.0
    %390 = vmatpush1.msra.mxu0 0.0
    %391 = vmatprep.subr.mxu0 0.0
    %392 = vmatpush1.msra.mxu0 0.0
    %393 = vmatprep.subr.mxu0 0.0
    %394 = vmatpush1.msra.mxu0 0.0
    %395 = vmatprep.subr.mxu0 0.0
    %396 = vmatpush1.msra.mxu0 0.0
    %397 = vmatprep.subr.mxu0 0.0
    %398 = vmatpush1.msra.mxu0 0.0
    %399 = vmatprep.mubr.f32.mxu0 0.0
    %400 = vmatmul.mubr.f32.gmra.mrb[0].mxu0 %v330
    %v401 = vpop.f32.mrb[0].mxu0
    %v402 = vadd.f32 %v328, %v401
    %v403 = vpop.f32.mrb[0].mxu0
    %404 = vmatprep.mubr.f32.mxu0 0.0
    %405 = vmatmul.mubr.f32.gmra.mrb[0].mxu0 %v333
    %v406 = vpop.f32.mrb[0].mxu0
    %v407 = vadd.f32 %v328, %v406
    %v408 = vpop.f32.mrb[0].mxu0
    %409 = vdwg.mxu0
    %v410 = vmul.f32 %v402, 0.01
    %v411 = vmul.f32 %v407, 0.01
    %v412 = vmax.f32 %v402, %v410
    %v413 = vmax.f32 %v407, %v411
    %v414 = vld [vmem:[#allocation2 + $0xe0] sm:$0xff]
    %v415 = vld [vmem:[#allocation2 + $0xe8] sm:$0xff]
    %v416 = vld [vmem:[#allocation2 + $0xf0] sm:$0xff]
    %v417 = vld [vmem:[#allocation2 + $0xf8] sm:$0xff]
    %v418 = vld [vmem:[#allocation2 + $0x100] sm:$0xff]
    %v419 = vld [vmem:[#allocation2 + $0x108] sm:$0xff]
    %v420 = vld [vmem:[#allocation2 + $0x110] sm:$0xff]
    %v421 = vld [vmem:[#allocation2 + $0x118] sm:$0xff]
    %v422 = vlaneseq
    %v423 = vshrl.u32 %v422, 7
    %v424 = vsub.s32 4, %v423
    %v425 = vrot.slane %v25, %v424
    %v427 = vsel %vm134, %v412, 0
    %v430 = vsel %vm134, %v413, 0
    %432 = vmatprep.subr.mxu0 0.0
    %433 = vmatpush1.msra.mxu0 %v414
    %434 = vmatprep.subr.mxu0 0.0
    %435 = vmatpush1.msra.mxu0 %v415
    %436 = vmatprep.subr.mxu0 0.0
    %437 = vmatpush1.msra.mxu0 %v416
    %438 = vmatprep.subr.mxu0 0.0
    %439 = vmatpush1.msra.mxu0 %v417
    %440 = vmatprep.subr.mxu0 0.0
    %441 = vmatpush1.msra.mxu0 %v418
    %442 = vmatprep.subr.mxu0 0.0
    %443 = vmatpush1.msra.mxu0 %v419
    %444 = vmatprep.subr.mxu0 0.0
    %445 = vmatpush1.msra.mxu0 %v420
    %446 = vmatprep.subr.mxu0 0.0
    %447 = vmatpush1.msra.mxu0 %v421
    %448 = vmatprep.subr.mxu0 0.0
    %449 = vmatpush1.msra.mxu0 0.0
    %450 = vmatprep.subr.mxu0 0.0
    %451 = vmatpush1.msra.mxu0 0.0
    %452 = vmatprep.subr.mxu0 0.0
    %453 = vmatpush1.msra.mxu0 0.0
    %454 = vmatprep.subr.mxu0 0.0
    %455 = vmatpush1.msra.mxu0 0.0
    %456 = vmatprep.subr.mxu0 0.0
    %457 = vmatpush1.msra.mxu0 0.0
    %458 = vmatprep.subr.mxu0 0.0
    %459 = vmatpush1.msra.mxu0 0.0
    %460 = vmatprep.subr.mxu0 0.0
    %461 = vmatpush1.msra.mxu0 0.0
    %462 = vmatprep.subr.mxu0 0.0
    %463 = vmatpush1.msra.mxu0 0.0
    %464 = vmatprep.subr.mxu0 0.0
    %465 = vmatpush1.msra.mxu0 0.0
    %466 = vmatprep.subr.mxu0 0.0
    %467 = vmatpush1.msra.mxu0 0.0
    %468 = vmatprep.subr.mxu0 0.0
    %469 = vmatpush1.msra.mxu0 0.0
    %470 = vmatprep.subr.mxu0 0.0
    %471 = vmatpush1.msra.mxu0 0.0
    %472 = vmatprep.subr.mxu0 0.0
    %473 = vmatpush1.msra.mxu0 0.0
    %474 = vmatprep.subr.mxu0 0.0
    %475 = vmatpush1.msra.mxu0 0.0
    %476 = vmatprep.subr.mxu0 0.0
    %477 = vmatpush1.msra.mxu0 0.0
    %478 = vmatprep.subr.mxu0 0.0
    %479 = vmatpush1.msra.mxu0 0.0
    %480 = vmatprep.subr.mxu0 0.0
    %481 = vmatpush1.msra.mxu0 0.0
    %482 = vmatprep.subr.mxu0 0.0
    %483 = vmatpush1.msra.mxu0 0.0
    %484 = vmatprep.subr.mxu0 0.0
    %485 = vmatpush1.msra.mxu0 0.0
    %486 = vmatprep.subr.mxu0 0.0
    %487 = vmatpush1.msra.mxu0 0.0
    %488 = vmatprep.subr.mxu0 0.0
    %489 = vmatpush1.msra.mxu0 0.0
    %490 = vmatprep.subr.mxu0 0.0
    %491 = vmatpush1.msra.mxu0 0.0
    %492 = vmatprep.subr.mxu0 0.0
    %493 = vmatpush1.msra.mxu0 0.0
    %494 = vmatprep.subr.mxu0 0.0
    %495 = vmatpush1.msra.mxu0 0.0
    %496 = vmatprep.mubr.f32.mxu0 0.0
    %497 = vmatmul.mubr.f32.gmra.mrb[0].mxu0 %v427
    %v498 = vpop.f32.mrb[0].mxu0
    %v499 = vadd.f32 %v425, %v498
    %v500 = vpop.f32.mrb[0].mxu0
    %501 = vmatprep.mubr.f32.mxu0 0.0
    %502 = vmatmul.mubr.f32.gmra.mrb[0].mxu0 %v430
    %v503 = vpop.f32.mrb[0].mxu0
    %v504 = vadd.f32 %v425, %v503
    %v505 = vpop.f32.mrb[0].mxu0
    %506 = vdwg.mxu0
    %v507 = vmul.f32 %v499, 0.01
    %v508 = vmul.f32 %v504, 0.01
    %v509 = vmax.f32 %v499, %v507
    %v510 = vmax.f32 %v504, %v508
    %v511 = vld [vmem:[#allocation2 + $0x120] sm:$0xff]
    %v512 = vld [vmem:[#allocation2 + $0x128] sm:$0xff]
    %v513 = vld [vmem:[#allocation2 + $0x130] sm:$0xff]
    %v514 = vld [vmem:[#allocation2 + $0x138] sm:$0xff]
    %v515 = vld [vmem:[#allocation2 + $0x140] sm:$0xff]
    %v516 = vld [vmem:[#allocation2 + $0x148] sm:$0xff]
    %v517 = vld [vmem:[#allocation2 + $0x150] sm:$0xff]
    %v518 = vld [vmem:[#allocation2 + $0x158] sm:$0xff]
    %v519 = vlaneseq
    %v520 = vshrl.u32 %v519, 7
    %v521 = vsub.s32 5, %v520
    %v522 = vrot.slane %v25, %v521
    %v524 = vsel %vm134, %v509, 0
    %v527 = vsel %vm134, %v510, 0
    %529 = vmatprep.subr.mxu0 0.0
    %530 = vmatpush1.msra.mxu0 %v511
    %531 = vmatprep.subr.mxu0 0.0
    %532 = vmatpush1.msra.mxu0 %v512
    %533 = vmatprep.subr.mxu0 0.0
    %534 = vmatpush1.msra.mxu0 %v513
    %535 = vmatprep.subr.mxu0 0.0
    %536 = vmatpush1.msra.mxu0 %v514
    %537 = vmatprep.subr.mxu0 0.0
    %538 = vmatpush1.msra.mxu0 %v515
    %539 = vmatprep.subr.mxu0 0.0
    %540 = vmatpush1.msra.mxu0 %v516
    %541 = vmatprep.subr.mxu0 0.0
    %542 = vmatpush1.msra.mxu0 %v517
    %543 = vmatprep.subr.mxu0 0.0
    %544 = vmatpush1.msra.mxu0 %v518
    %545 = vmatprep.subr.mxu0 0.0
    %546 = vmatpush1.msra.mxu0 0.0
    %547 = vmatprep.subr.mxu0 0.0
    %548 = vmatpush1.msra.mxu0 0.0
    %549 = vmatprep.subr.mxu0 0.0
    %550 = vmatpush1.msra.mxu0 0.0
    %551 = vmatprep.subr.mxu0 0.0
    %552 = vmatpush1.msra.mxu0 0.0
    %553 = vmatprep.subr.mxu0 0.0
    %554 = vmatpush1.msra.mxu0 0.0
    %555 = vmatprep.subr.mxu0 0.0
    %556 = vmatpush1.msra.mxu0 0.0
    %557 = vmatprep.subr.mxu0 0.0
    %558 = vmatpush1.msra.mxu0 0.0
    %559 = vmatprep.subr.mxu0 0.0
    %560 = vmatpush1.msra.mxu0 0.0
    %561 = vmatprep.subr.mxu0 0.0
    %562 = vmatpush1.msra.mxu0 0.0
    %563 = vmatprep.subr.mxu0 0.0
    %564 = vmatpush1.msra.mxu0 0.0
    %565 = vmatprep.subr.mxu0 0.0
    %566 = vmatpush1.msra.mxu0 0.0
    %567 = vmatprep.subr.mxu0 0.0
    %568 = vmatpush1.msra.mxu0 0.0
    %569 = vmatprep.subr.mxu0 0.0
    %570 = vmatpush1.msra.mxu0 0.0
    %571 = vmatprep.subr.mxu0 0.0
    %572 = vmatpush1.msra.mxu0 0.0
    %573 = vmatprep.subr.mxu0 0.0
    %574 = vmatpush1.msra.mxu0 0.0
    %575 = vmatprep.subr.mxu0 0.0
    %576 = vmatpush1.msra.mxu0 0.0
    %577 = vmatprep.subr.mxu0 0.0
    %578 = vmatpush1.msra.mxu0 0.0
    %579 = vmatprep.subr.mxu0 0.0
    %580 = vmatpush1.msra.mxu0 0.0
    %581 = vmatprep.subr.mxu0 0.0
    %582 = vmatpush1.msra.mxu0 0.0
    %583 = vmatprep.subr.mxu0 0.0
    %584 = vmatpush1.msra.mxu0 0.0
    %585 = vmatprep.subr.mxu0 0.0
    %586 = vmatpush1.msra.mxu0 0.0
    %587 = vmatprep.subr.mxu0 0.0
    %588 = vmatpush1.msra.mxu0 0.0
    %589 = vmatprep.subr.mxu0 0.0
    %590 = vmatpush1.msra.mxu0 0.0
    %591 = vmatprep.subr.mxu0 0.0
    %592 = vmatpush1.msra.mxu0 0.0
    %593 = vmatprep.mubr.f32.mxu0 0.0
    %594 = vmatmul.mubr.f32.gmra.mrb[0].mxu0 %v524
    %v595 = vpop.f32.mrb[0].mxu0
    %v596 = vadd.f32 %v522, %v595
    %v597 = vpop.f32.mrb[0].mxu0
    %598 = vmatprep.mubr.f32.mxu0 0.0
    %599 = vmatmul.mubr.f32.gmra.mrb[0].mxu0 %v527
    %v600 = vpop.f32.mrb[0].mxu0
    %v601 = vadd.f32 %v522, %v600
    %v602 = vpop.f32.mrb[0].mxu0
    %603 = vdwg.mxu0
    %v604 = vmul.f32 %v596, 0.01
    %v605 = vmul.f32 %v601, 0.01
    %v606 = vmax.f32 %v596, %v604
    %v607 = vmax.f32 %v601, %v605
    %v608 = vld [vmem:[#allocation2 + $0x160] sm:$0xff]
    %v609 = vld [vmem:[#allocation2 + $0x168] sm:$0xff]
    %v610 = vld [vmem:[#allocation2 + $0x170] sm:$0xff]
    %v611 = vld [vmem:[#allocation2 + $0x178] sm:$0xff]
    %v612 = vld [vmem:[#allocation2 + $0x180] sm:$0xff]
    %v613 = vld [vmem:[#allocation2 + $0x188] sm:$0xff]
    %v614 = vld [vmem:[#allocation2 + $0x190] sm:$0xff]
    %v615 = vld [vmem:[#allocation2 + $0x198] sm:$0xff]
    %v616 = vlaneseq
    %v617 = vshrl.u32 %v616, 7
    %v618 = vsub.s32 6, %v617
    %v619 = vrot.slane %v25, %v618
    %v621 = vsel %vm134, %v606, 0
    %v624 = vsel %vm134, %v607, 0
    %626 = vmatprep.subr.mxu0 0.0
    %627 = vmatpush1.msra.mxu0 %v608
    %628 = vmatprep.subr.mxu0 0.0
    %629 = vmatpush1.msra.mxu0 %v609
    %630 = vmatprep.subr.mxu0 0.0
    %631 = vmatpush1.msra.mxu0 %v610
    %632 = vmatprep.subr.mxu0 0.0
    %633 = vmatpush1.msra.mxu0 %v611
    %634 = vmatprep.subr.mxu0 0.0
    %635 = vmatpush1.msra.mxu0 %v612
    %636 = vmatprep.subr.mxu0 0.0
    %637 = vmatpush1.msra.mxu0 %v613
    %638 = vmatprep.subr.mxu0 0.0
    %639 = vmatpush1.msra.mxu0 %v614
    %640 = vmatprep.subr.mxu0 0.0
    %641 = vmatpush1.msra.mxu0 %v615
    %642 = vmatprep.subr.mxu0 0.0
    %643 = vmatpush1.msra.mxu0 0.0
    %644 = vmatprep.subr.mxu0 0.0
    %645 = vmatpush1.msra.mxu0 0.0
    %646 = vmatprep.subr.mxu0 0.0
    %647 = vmatpush1.msra.mxu0 0.0
    %648 = vmatprep.subr.mxu0 0.0
    %649 = vmatpush1.msra.mxu0 0.0
    %650 = vmatprep.subr.mxu0 0.0
    %651 = vmatpush1.msra.mxu0 0.0
    %652 = vmatprep.subr.mxu0 0.0
    %653 = vmatpush1.msra.mxu0 0.0
    %654 = vmatprep.subr.mxu0 0.0
    %655 = vmatpush1.msra.mxu0 0.0
    %656 = vmatprep.subr.mxu0 0.0
    %657 = vmatpush1.msra.mxu0 0.0
    %658 = vmatprep.subr.mxu0 0.0
    %659 = vmatpush1.msra.mxu0 0.0
    %660 = vmatprep.subr.mxu0 0.0
    %661 = vmatpush1.msra.mxu0 0.0
    %662 = vmatprep.subr.mxu0 0.0
    %663 = vmatpush1.msra.mxu0 0.0
    %664 = vmatprep.subr.mxu0 0.0
    %665 = vmatpush1.msra.mxu0 0.0
    %666 = vmatprep.subr.mxu0 0.0
    %667 = vmatpush1.msra.mxu0 0.0
    %668 = vmatprep.subr.mxu0 0.0
    %669 = vmatpush1.msra.mxu0 0.0
    %670 = vmatprep.subr.mxu0 0.0
    %671 = vmatpush1.msra.mxu0 0.0
    %672 = vmatprep.subr.mxu0 0.0
    %673 = vmatpush1.msra.mxu0 0.0
    %674 = vmatprep.subr.mxu0 0.0
    %675 = vmatpush1.msra.mxu0 0.0
    %676 = vmatprep.subr.mxu0 0.0
    %677 = vmatpush1.msra.mxu0 0.0
    %678 = vmatprep.subr.mxu0 0.0
    %679 = vmatpush1.msra.mxu0 0.0
    %680 = vmatprep.subr.mxu0 0.0
    %681 = vmatpush1.msra.mxu0 0.0
    %682 = vmatprep.subr.mxu0 0.0
    %683 = vmatpush1.msra.mxu0 0.0
    %684 = vmatprep.subr.mxu0 0.0
    %685 = vmatpush1.msra.mxu0 0.0
    %686 = vmatprep.subr.mxu0 0.0
    %687 = vmatpush1.msra.mxu0 0.0
    %688 = vmatprep.subr.mxu0 0.0
    %689 = vmatpush1.msra.mxu0 0.0
    %690 = vmatprep.mubr.f32.mxu0 0.0
    %691 = vmatmul.mubr.f32.gmra.mrb[0].mxu0 %v621
    %v692 = vpop.f32.mrb[0].mxu0
    %v693 = vadd.f32 %v619, %v692
    %v694 = vpop.f32.mrb[0].mxu0
    %695 = vmatprep.mubr.f32.mxu0 0.0
    %696 = vmatmul.mubr.f32.gmra.mrb[0].mxu0 %v624
    %v697 = vpop.f32.mrb[0].mxu0
    %v698 = vadd.f32 %v619, %v697
    %v699 = vpop.f32.mrb[0].mxu0
    %700 = vdwg.mxu0
    %v701 = vmax.f32 %v693, 0.0
    %v702 = vmax.f32 %v698, 0.0
    %v703 = vand.u32 2147483647, %v693
    %v704 = vand.u32 2147483647, %v698
    %v705 = vsub.f32 0.0, %v703
    %v706 = vsub.f32 0.0, %v704
    %v707 = vmul.f32 %v705, 1.442695
    %v708 = vpow.pop %v707
    %v709 = vmul.f32 %v706, 1.442695
    %v710 = vpow.pop %v709
    %v711 = vadd.f32 %v708, 1.0
    %v712 = vlog2.pop %v711
    %v713 = vmul.f32 %v712, 0.6931472
    %v714 = vmul.f32 -0.5, %v708
    %v715 = vadd.f32 %v714, 1.0
    %v716 = vmul.f32 %v715, %v708
    %v717 = vand.u32 2147483647, %v708
    %vm718 = vcmp.lt.f32.partialorder %v717, 0.0004427343
    %v719 = vsel %vm718, %v716, %v713
    %v720 = vadd.f32 %v710, 1.0
    %v721 = vlog2.pop %v720
    %v722 = vmul.f32 %v721, 0.6931472
    %v723 = vmul.f32 -0.5, %v710
    %v724 = vadd.f32 %v723, 1.0
    %v725 = vmul.f32 %v724, %v710
    %v726 = vand.u32 2147483647, %v710
    %vm727 = vcmp.lt.f32.partialorder %v726, 0.0004427343
    %v728 = vsel %vm727, %v725, %v722
    %v729 = vadd.f32 %v701, %v719
    %v730 = vadd.f32 %v702, %v728
    %v731 = vsub.f32 0.0, %v729
    %v732 = vsub.f32 0.0, %v730
    %vm733 = vcmask 15360
    %734 = vst.msk [vmem:[%s2] sm:$0xff] %vm733, %v731
    %735 = vst.msk [vmem:[%s2 + $0x8] sm:$0xff] %vm733, %v732
    // Predicated region
    $region14: #{forward.1} parent=1 // pred_check
      _
    $region15: #{forward.1} parent=1 // pred_check_branch
      %737 = sbr.rel (0) target = $region17
    $region16: #{forward.1} parent=1 // pred_region
      _
    $region17: #{forward.1} parent=1 // pred_fallthru
      _
    // Predicated region
    $region18: #{forward.1} parent=1 // pred_check
      _
    $region19: #{forward.1} parent=1 // pred_check_branch
      %739 = sbr.rel (0) target = $region21
    $region20: #{forward.1} parent=1 // pred_region
      _
    $region21: #{forward.1} parent=1 // pred_fallthru
      _
    %740 = vsyncpa [#allocation3], 1

</llo_original>
